<compile_context>
chip_gen: v6e
topology: v6e:2x2x1
jax: 0.10.0
libtpu: 0.0.40
codegen_flags: <defaults>
</compile_context>

<pallas_src>
import jax
import jax.numpy as jnp
from jax.experimental import pallas as pl
from jax.experimental.pallas import tpu as pltpu


def _round_up(x, m):
    return (x + m - 1) // m * m


def _single_stream_kernel(pooled_ref, wcomb_ref, clsT_ref, out_ref):
    """One batch-tile of the SingleStreamClassifier forward.

    pooled_ref : (TB, Pd)   bf16  mean-pooled flattened patches
    wcomb_ref  : (Pd, De)   bf16  folded backbone weight (w_patch @ w_proj), resident
    clsT_ref   : (De, Ncp)  bf16  exp(logit_scale) * normalized classifier, transposed, resident
    out_ref    : (TB, Ncp)        logits
    """
    # ---- synthetic (linear) CLIP visual backbone: ONE folded matmul -----
    feat = jnp.dot(pooled_ref[...], wcomb_ref[...],
                   preferred_element_type=jnp.float32)           # (TB, De) f32

    # ---- head: x /= ||x|| ; logits = x @ (exp(s) * cls).T ---------------
    # rsqrt -> EUP slot; the eps keeps all-zero padded batch rows finite
    # (their logits come out as exact zeros and are sliced off afterwards).
    sumsq = jnp.sum(feat * feat, axis=-1, keepdims=True)         # (TB, 1)
    inv_norm = jax.lax.rsqrt(jnp.maximum(sumsq, 1e-12))
    feat = (feat * inv_norm).astype(clsT_ref.dtype)              # (TB, De) bf16
    out_ref[...] = jnp.dot(feat, clsT_ref[...],
                           preferred_element_type=jnp.float32
                           ).astype(out_ref.dtype)               # (TB, Ncp)


def single_stream_classifier(x, w_patch, w_proj, classifier, logit_scale,
                             patch=8, matmul_dtype=jnp.bfloat16,
                             out_dtype=jnp.float32):
    """x: NCHW float32 [B, C, H, W]  ->  logits [B, num_classes]."""
    B, C, H, W = x.shape
    assert H % patch == 0 and W % patch == 0
    Pd = C * patch * patch
    De = w_proj.shape[1]
    Nc = classifier.shape[0]

    # ---- host-side glue (layout + constant-parameter work only) ---------
    # Mean-pool the patch grid directly on the original NCHW layout: a
    # fusable strided reduction, no 6-D transpose or materialized
    # (B, Np, Pd) copy.  Feature order stays (C, p_row, p_col) == im2col.
    pooled = x.reshape(B, C, H // patch, patch, W // patch, patch)
    pooled = pooled.astype(jnp.float32).mean(axis=(2, 4)).reshape(B, Pd)

    # Fold the two linear backbone matmuls into one weight (f32, then bf16).
    # TODO(synk): pool-before-matmul and this fold are exact only for the
    # linear surrogate backbone; a real (nonlinear) CLIP ViT must not use them.
    w_comb = jnp.dot(w_patch.astype(jnp.float32), w_proj.astype(jnp.float32))

    # Classifier: normalize once (fixed parameter for the call), fold
    # exp(logit_scale) in, pad classes to a 128-lane multiple (lane-dense
    # output tile) and pre-transpose so the kernel's final matmul is a
    # plain dot with no implicit transpose.
    cls = classifier.astype(jnp.float32)
    cls = cls / jnp.linalg.norm(cls, axis=-1, keepdims=True)
    cls = jnp.exp(jnp.asarray(logit_scale, jnp.float32)) * cls
    Nc_pad = _round_up(Nc, 128)
    cls_t = jnp.pad(cls, ((0, Nc_pad - Nc), (0, 0))).T            # (De, Nc_pad)

    # Batch tiling: pad rows to a sublane multiple and pick tile_b so that
    #   * grid >= 2 (and >= 4 once there is enough work) -> both v7x
    #     TensorCores get batch tiles and input/output tiles pipeline,
    #   * tiles are capped at 512 rows (amortizes ~0.35 us/step grid
    #     overhead) without inflating batch padding to a full fixed tile,
    #   * per-step VMEM (double-buffered pooled + out tiles plus resident
    #     weights) stays far under v5e's 16 MiB scoped default and v7x's
    #     64 MiB physical VMEM at these shapes.
    B_pad = _round_up(B, 8)
    if B_pad <= 8:
        tile_b = B_pad                       # too little work to split
    else:
        n_tiles = 4 if B_pad >= 64 else 2    # >= 2 per TC when batch allows
        n_tiles = max(n_tiles, pl.cdiv(B_pad, 512))
        tile_b = max(8, min(512, _round_up(pl.cdiv(B_pad, n_tiles), 8)))
        B_pad = _round_up(B_pad, tile_b)
    pooled = jnp.pad(pooled, ((0, B_pad - B), (0, 0)))

    # bf16 MXU inputs, f32 accumulation (halves operand DMA; normalization
    # math stays f32 inside the kernel -- mandatory on v5e).
    pooled = pooled.astype(matmul_dtype)
    w_comb = w_comb.astype(matmul_dtype)
    cls_t = cls_t.astype(matmul_dtype)

    grid = (B_pad // tile_b,)
    out = pl.pallas_call(
        _single_stream_kernel,
        out_shape=jax.ShapeDtypeStruct((B_pad, Nc_pad), out_dtype),
        grid=grid,
        in_specs=[
            pl.BlockSpec((tile_b, Pd), lambda i: (i, 0)),         # batch tiles
            pl.BlockSpec((Pd, De), lambda i: (0, 0)),             # resident
            pl.BlockSpec((De, Nc_pad), lambda i: (0, 0)),         # resident
        ],
        out_specs=pl.BlockSpec((tile_b, Nc_pad), lambda i: (i, 0)),
        compiler_params=pltpu.CompilerParams(
            # batch tiles are independent -> shard across v7x's 2 TCs
            dimension_semantics=("parallel",)),
    )(pooled, w_comb, cls_t)

    return out[:B, :Nc]


def _reference(x, w_patch, w_proj, classifier, logit_scale, patch=8,
               matmul_dtype=jnp.bfloat16):
    """Pure-JAX mirror of the PyTorch forward (patch-embed -> pool -> proj
    -> normalize -> exp(logit_scale) * x @ cls.T), using a similar
    mixed-precision matmul policy so the correctness check stays tight."""
    B, C, H, W = x.shape
    Np = (H // patch) * (W // patch)
    patches = x.reshape(B, C, H // patch, patch, W // patch, patch)
    patches = patches.transpose(0, 2, 4, 1, 3, 5).reshape(B * Np, -1)
    patches = patches.astype(jnp.float32)
    h = jnp.dot(patches.astype(matmul_dtype), w_patch.astype(matmul_dtype),
                preferred_element_type=jnp.float32)
    h = h.reshape(B, Np, -1).mean(axis=1)
    feat = jnp.dot(h.astype(matmul_dtype), w_proj.astype(matmul_dtype),
                   preferred_element_type=jnp.float32)
    feat = feat / jnp.linalg.norm(feat, axis=-1, keepdims=True)
    cls = classifier / jnp.linalg.norm(classifier, axis=-1, keepdims=True)
    logits = jnp.exp(logit_scale) * jnp.dot(
        feat.astype(matmul_dtype), cls.T.astype(matmul_dtype),
        preferred_element_type=jnp.float32)
    return logits


if __name__ == "__main__":
    key = jax.random.PRNGKey(0)
    k_x, k_wp, k_pr, k_cls = jax.random.split(key, 4)

    # small shapes consistent with the module
    B, C, H, W = 2, 4, 16, 16        # image input, NCHW
    P = 8                            # patch size -> 4 patches per image
    Dh = 128                         # backbone hidden width
    De = 128                         # CLIP embedding dim
    Nc = 8                           # number of classnames

    x = jax.random.normal(k_x, (B, C, H, W), dtype=jnp.float32)

    # deterministic synthetic parameters (no checkpoint loading)
    w_patch = 0.02 * jax.random.normal(k_wp, (C * P * P, Dh), dtype=jnp.float32)
    w_proj = 0.02 * jax.random.normal(k_pr, (Dh, De), dtype=jnp.float32)
    # text-derived class embeddings (self.classifier); pre-normalized in
    # _init_classifier but re-normalized in forward anyway.
    classifier = jax.random.normal(k_cls, (Nc, De), dtype=jnp.float32)
    classifier = classifier / jnp.linalg.norm(classifier, axis=-1,
                                              keepdims=True)
    logit_scale = jnp.float32(jnp.log(1.0 / 0.07))   # CLIP init

    # TODO(synk): the real CLIP ViT backbone (multi-layer transformer) is
    # represented by a linear patch-embed + pool + projection surrogate.

    logits = single_stream_classifier(x, w_patch, w_proj, classifier,
                                      logit_scale, patch=P)
    logits = jax.block_until_ready(logits)

    ref = _reference(x, w_patch, w_proj, classifier, logit_scale, patch=P)
    assert logits.shape == (B, Nc)
    assert jnp.allclose(logits, ref, atol=5e-2, rtol=5e-2), (
        jnp.max(jnp.abs(logits - ref)))

    print("KERNEL_OK")
</pallas_src>

<mosaic_0001>
module attributes {stable_mosaic.version = 11 : i64} {
  func.func @_single_stream_kernel(%arg0: i32, %arg1: memref<8x256xbf16, #tpu.memory_space<vmem>>, %arg2: memref<256x128xbf16, #tpu.memory_space<vmem>>, %arg3: memref<128x128xbf16, #tpu.memory_space<vmem>>, %arg4: memref<8x128xf32, #tpu.memory_space<vmem>>) attributes {dimension_semantics = [#tpu.dimension_semantics<parallel>], iteration_bounds = array<i64: 1>, scalar_prefetch = 0 : i64, scratch_operands = 0 : i64, tpu.core_type = #tpu.core_type<tc>, window_params = [{transform_indices = @transform_0, window_bounds = array<i64: 8, 256>}, {pipeline_mode = #tpu.pipeline_mode<synchronous>, transform_indices = @transform_1, window_bounds = array<i64: 256, 128>}, {pipeline_mode = #tpu.pipeline_mode<synchronous>, transform_indices = @transform_2, window_bounds = array<i64: 128, 128>}, {transform_indices = @transform_3, window_bounds = array<i64: 8, 128>}]} {
    %c0 = arith.constant 0 : index
    %c0_0 = arith.constant 0 : index
    %0 = vector.load %arg1[%c0, %c0_0] : memref<8x256xbf16, #tpu.memory_space<vmem>>, vector<8x256xbf16>
    %c0_1 = arith.constant 0 : index
    %c0_2 = arith.constant 0 : index
    %1 = vector.load %arg2[%c0_1, %c0_2] : memref<256x128xbf16, #tpu.memory_space<vmem>>, vector<256x128xbf16>
    %cst = arith.constant dense<0.000000e+00> : vector<8x128xf32>
    %2 = tpu.matmul %0, %1, %cst {dimension_numbers = #tpu.dot_dimension_numbers<[1], [0], [0], [1], [0, 0, 1, 1], [], []>} : vector<8x256xbf16>, vector<256x128xbf16>, vector<8x128xf32> -> vector<8x128xf32>
    %3 = arith.mulf %2, %2 : vector<8x128xf32>
    %cst_3 = arith.constant dense<0.000000e+00> : vector<8xf32>
    %4 = vector.multi_reduction <add>, %3, %cst_3 [1] : vector<8x128xf32> to vector<8xf32>
    %5 = vector.shape_cast %4 : vector<8xf32> to vector<8x1xf32>
    %cst_4 = arith.constant 9.99999996E-13 : f32
    %6 = vector.broadcast %cst_4 : f32 to vector<8x1xf32>
    %7 = arith.maximumf %5, %6 : vector<8x1xf32>
    %8 = math.rsqrt %7 : vector<8x1xf32>
    %9 = vector.broadcast %8 : vector<8x1xf32> to vector<8x128xf32>
    %10 = arith.mulf %2, %9 : vector<8x128xf32>
    %11 = arith.truncf %10 : vector<8x128xf32> to vector<8x128xbf16>
    %c0_5 = arith.constant 0 : index
    %c0_6 = arith.constant 0 : index
    %12 = vector.load %arg3[%c0_5, %c0_6] : memref<128x128xbf16, #tpu.memory_space<vmem>>, vector<128x128xbf16>
    %cst_7 = arith.constant dense<0.000000e+00> : vector<8x128xf32>
    %13 = tpu.matmul %11, %12, %cst_7 {dimension_numbers = #tpu.dot_dimension_numbers<[1], [0], [0], [1], [0, 0, 1, 1], [], []>} : vector<8x128xbf16>, vector<128x128xbf16>, vector<8x128xf32> -> vector<8x128xf32>
    %c0_8 = arith.constant 0 : index
    %c0_9 = arith.constant 0 : index
    %14 = vector.load %arg4[%c0_8, %c0_9] : memref<8x128xf32, #tpu.memory_space<vmem>>, vector<8x128xf32>
    tpu.vector_store %arg4[%c0_8, %c0_9], %13 {strides = array<i32>} : memref<8x128xf32, #tpu.memory_space<vmem>>, vector<8x128xf32>,
    return
  }
  func.func @transform_0(%arg0: i32) -> (i32, i32) {
    %c0_i32 = arith.constant 0 : i32
    %c0_i32_0 = arith.constant 0 : i32
    return %arg0, %c0_i32 : i32, i32
  }
  func.func @transform_1(%arg0: i32) -> (i32, i32) {
    %c0_i32 = arith.constant 0 : i32
    %c0_i32_0 = arith.constant 0 : i32
    %c0_i32_1 = arith.constant 0 : i32
    return %c0_i32, %c0_i32_0 : i32, i32
  }
  func.func @transform_2(%arg0: i32) -> (i32, i32) {
    %c0_i32 = arith.constant 0 : i32
    %c0_i32_0 = arith.constant 0 : i32
    %c0_i32_1 = arith.constant 0 : i32
    return %c0_i32, %c0_i32_0 : i32, i32
  }
  func.func @transform_3(%arg0: i32) -> (i32, i32) {
    %c0_i32 = arith.constant 0 : i32
    %c0_i32_0 = arith.constant 0 : i32
    return %arg0, %c0_i32 : i32, i32
  }
}

</mosaic_0001>

<llo_original>
// kernel: tpu_custom_call.1
$region0: #{tpu_custom_call.1}
  #allocation0 [shape = 'u32[]', space=smem, size = 0x4, offset = 0x4, fixed_abs, tag = 'smem constant byte address 0x4 - core index']
  #allocation1 [shape = 'u32[144,128]{1,0:T(1,128)}', space=vmem, size = 0x12000, scoped, tag = 'internal scratch']
  %s0 = inlined_call_operand.hbm [shape: bf16[8,256], index: 0, kind: input, shape index: {}]
  %s1 = inlined_call_operand.hbm [shape: bf16[256,128], index: 1, kind: input, shape index: {}]
  %s2 = inlined_call_operand.hbm [shape: bf16[128,128], index: 2, kind: input, shape index: {}]
  %s3 = inlined_call_operand.hbm [shape: f32[8,128], index: 3, kind: output, shape index: {}]
  %s4 = sld [smem:[#allocation0]]
  $region34: #{tpu_custom_call.1} parent=0
    _
  %s6 = ssub.s32 1, %s4
  %s7 = scalar_select 0, %s6, %s4
  $region1: #{tpu_custom_call.1} parent=0
    #allocation2 [shape = 'u8[4096]{0}', space=vmem, size = 0x1000, scoped, tag = 'input window, operand 0, single buffered']
    #allocation3 [shape = 's32[1]{0}', space=sflag, size = 0x4, scoped, tag = 'scoped memory for tpu_custom_call.1']
    #allocation4 [shape = 's32[1]{0}', space=sflag, size = 0x4, scoped, tag = 'scoped memory for tpu_custom_call.1']
    #allocation5 [shape = 'u8[65536]{0}', space=vmem, size = 0x10000, scoped, tag = 'input window, operand 1, single buffered']
    #allocation6 [shape = 's32[1]{0}', space=sflag, size = 0x4, scoped, tag = 'scoped memory for tpu_custom_call.1']
    #allocation7 [shape = 'u8[32768]{0}', space=vmem, size = 0x8000, scoped, tag = 'input window, operand 2, single buffered']
    #allocation8 [shape = 'u8[4096]{0}', space=vmem, size = 0x1000, scoped, tag = 'output window, operand 0, single buffered']
    %8 = vsyncpa [#allocation3], 0
    %9 = vsyncpa [#allocation6], 0
    %10 = vsyncpa [#allocation4], 0
    // Predicated region
    $region2: #{tpu_custom_call.1} parent=1 // pred_check
      _
    $region3: #{tpu_custom_call.1} parent=1 // pred_check_branch
      %12 = sbr.rel (0) target = $region5
    $region4: #{tpu_custom_call.1} parent=1 // pred_region
      %s14 = ssub.s32 128, 128
      %15 = vsyncadd [#allocation3], %s14
      %s17 = sshll.u32 [#allocation2], 4
      %s18 = int_to_ptr.vmem [resolvable:$true] %s17
      %20 = dma.hbm_to_vmem [thread:$0]  %s0, 128, %s18, [#allocation3]
    $region5: #{tpu_custom_call.1} parent=1 // pred_fallthru
      _
    // Predicated region
    $region6: #{tpu_custom_call.1} parent=1 // pred_check
      _
    $region7: #{tpu_custom_call.1} parent=1 // pred_check_branch
      %22 = sbr.rel (0) target = $region9
    $region8: #{tpu_custom_call.1} parent=1 // pred_region
      %s24 = ssub.s32 2048, 2048
      %25 = vsyncadd [#allocation6], %s24
      %s26 = sshll.u32 [#allocation5], 4
      %s27 = int_to_ptr.vmem [resolvable:$true] %s26
      %32 = dma.hbm_to_vmem [thread:$0]  %s1, 2048, %s27, [#allocation6], 64, 64, 4
    $region9: #{tpu_custom_call.1} parent=1 // pred_fallthru
      _
    // Predicated region
    $region10: #{tpu_custom_call.1} parent=1 // pred_check
      _
    $region11: #{tpu_custom_call.1} parent=1 // pred_check_branch
      %34 = sbr.rel (0) target = $region13
    $region12: #{tpu_custom_call.1} parent=1 // pred_region
      %s36 = ssub.s32 1024, 1024
      %37 = vsyncadd [#allocation6], %s36
      %s38 = sshll.u32 [#allocation7], 4
      %s39 = int_to_ptr.vmem [resolvable:$true] %s38
      %44 = dma.hbm_to_vmem [thread:$0]  %s2, 1024, %s39, [#allocation6], 64, 64, 4
    $region13: #{tpu_custom_call.1} parent=1 // pred_fallthru
      _
    // Predicated region
    $region14: #{tpu_custom_call.1} parent=1 // pred_check
      _
    $region15: #{tpu_custom_call.1} parent=1 // pred_check_branch
      %46 = sbr.rel (0) target = $region17
    $region16: #{tpu_custom_call.1} parent=1 // pred_region
      %47 = dma.done [#allocation3], 128
    $region17: #{tpu_custom_call.1} parent=1 // pred_fallthru
      _
    // Predicated region
    $region18: #{tpu_custom_call.1} parent=1 // pred_check
      _
    $region19: #{tpu_custom_call.1} parent=1 // pred_check_branch
      %49 = sbr.rel (0) target = $region21
    $region20: #{tpu_custom_call.1} parent=1 // pred_region
      %50 = dma.done [#allocation6], 2048
    $region21: #{tpu_custom_call.1} parent=1 // pred_fallthru
      _
    // Predicated region
    $region22: #{tpu_custom_call.1} parent=1 // pred_check
      _
    $region23: #{tpu_custom_call.1} parent=1 // pred_check_branch
      %52 = sbr.rel (0) target = $region25
    $region24: #{tpu_custom_call.1} parent=1 // pred_region
      %53 = dma.done [#allocation6], 1024
    $region25: #{tpu_custom_call.1} parent=1 // pred_fallthru
      _
    %v55 = vld [vmem:[#allocation2] sm:$0xff]
    %v56 = vld [vmem:[#allocation5] sm:$0xf]
    %v57 = vld [vmem:[#allocation5 + $0x4] sm:$0xf]
    %v58 = vld [vmem:[#allocation5 + $0x8] sm:$0xf]
    %v59 = vld [vmem:[#allocation5 + $0xc] sm:$0xf]
    %v60 = vld [vmem:[#allocation5 + $0x10] sm:$0xf]
    %v61 = vld [vmem:[#allocation5 + $0x14] sm:$0xf]
    %v62 = vld [vmem:[#allocation5 + $0x18] sm:$0xf]
    %v63 = vld [vmem:[#allocation5 + $0x1c] sm:$0xf]
    %v64 = vld [vmem:[#allocation5 + $0x20] sm:$0xf]
    %v65 = vld [vmem:[#allocation5 + $0x24] sm:$0xf]
    %v66 = vld [vmem:[#allocation5 + $0x28] sm:$0xf]
    %v67 = vld [vmem:[#allocation5 + $0x2c] sm:$0xf]
    %v68 = vld [vmem:[#allocation5 + $0x30] sm:$0xf]
    %v69 = vld [vmem:[#allocation5 + $0x34] sm:$0xf]
    %v70 = vld [vmem:[#allocation5 + $0x38] sm:$0xf]
    %v71 = vld [vmem:[#allocation5 + $0x3c] sm:$0xf]
    %v72 = vld [vmem:[#allocation5 + $0x40] sm:$0xf]
    %v73 = vld [vmem:[#allocation5 + $0x44] sm:$0xf]
    %v74 = vld [vmem:[#allocation5 + $0x48] sm:$0xf]
    %v75 = vld [vmem:[#allocation5 + $0x4c] sm:$0xf]
    %v76 = vld [vmem:[#allocation5 + $0x50] sm:$0xf]
    %v77 = vld [vmem:[#allocation5 + $0x54] sm:$0xf]
    %v78 = vld [vmem:[#allocation5 + $0x58] sm:$0xf]
    %v79 = vld [vmem:[#allocation5 + $0x5c] sm:$0xf]
    %v80 = vld [vmem:[#allocation5 + $0x60] sm:$0xf]
    %v81 = vld [vmem:[#allocation5 + $0x64] sm:$0xf]
    %v82 = vld [vmem:[#allocation5 + $0x68] sm:$0xf]
    %v83 = vld [vmem:[#allocation5 + $0x6c] sm:$0xf]
    %v84 = vld [vmem:[#allocation5 + $0x70] sm:$0xf]
    %v85 = vld [vmem:[#allocation5 + $0x74] sm:$0xf]
    %v86 = vld [vmem:[#allocation5 + $0x78] sm:$0xf]
    %v87 = vld [vmem:[#allocation5 + $0x7c] sm:$0xf]
    %v89 = vunpack.c.l.b16 %v55
    %v90 = vunpack.c.h.b16 %v55
    %v91 = vpack.c.b16 %v89, %v89
    %v92 = vpack.c.b16 %v90, %v90
    %v127 = vunpack.c.l.b16 %v56
    %v128 = vunpack.c.l.b16 %v57
    %v129 = vunpack.c.l.b16 %v58
    %v130 = vunpack.c.l.b16 %v59
    %v131 = vunpack.c.l.b16 %v60
    %v132 = vunpack.c.l.b16 %v61
    %v133 = vunpack.c.l.b16 %v62
    %v134 = vunpack.c.l.b16 %v63
    %v135 = vunpack.c.l.b16 %v64
    %v136 = vunpack.c.l.b16 %v65
    %v137 = vunpack.c.l.b16 %v66
    %v138 = vunpack.c.l.b16 %v67
    %v139 = vunpack.c.l.b16 %v68
    %v140 = vunpack.c.l.b16 %v69
    %v141 = vunpack.c.l.b16 %v70
    %v142 = vunpack.c.l.b16 %v71
    %v143 = vunpack.c.l.b16 %v72
    %v144 = vunpack.c.l.b16 %v73
    %v145 = vunpack.c.l.b16 %v74
    %v146 = vunpack.c.l.b16 %v75
    %v147 = vunpack.c.l.b16 %v76
    %v148 = vunpack.c.l.b16 %v77
    %v149 = vunpack.c.l.b16 %v78
    %v150 = vunpack.c.l.b16 %v79
    %v151 = vunpack.c.l.b16 %v80
    %v152 = vunpack.c.l.b16 %v81
    %v153 = vunpack.c.l.b16 %v82
    %v154 = vunpack.c.l.b16 %v83
    %v155 = vunpack.c.l.b16 %v84
    %v156 = vunpack.c.l.b16 %v85
    %v157 = vunpack.c.l.b16 %v86
    %v158 = vunpack.c.l.b16 %v87
    %v159 = vpack.c.b16 %v128, %v127
    %v160 = vpack.c.b16 %v130, %v129
    %v161 = vpack.c.b16 %v132, %v131
    %v162 = vpack.c.b16 %v134, %v133
    %v163 = vpack.c.b16 %v136, %v135
    %v164 = vpack.c.b16 %v138, %v137
    %v165 = vpack.c.b16 %v140, %v139
    %v166 = vpack.c.b16 %v142, %v141
    %v167 = vpack.c.b16 %v144, %v143
    %v168 = vpack.c.b16 %v146, %v145
    %v169 = vpack.c.b16 %v148, %v147
    %v170 = vpack.c.b16 %v150, %v149
    %v171 = vpack.c.b16 %v152, %v151
    %v172 = vpack.c.b16 %v154, %v153
    %v173 = vpack.c.b16 %v156, %v155
    %v174 = vpack.c.b16 %v158, %v157
    %191 = vmatprep.subr.bf16.mxu0 0
    %192 = vmatpush1.bf16.msra.mxu0 %v166
    %193 = vmatprep.subr.bf16.mxu0 0
    %194 = vmatpush1.bf16.msra.mxu0 %v165
    %195 = vmatprep.subr.bf16.mxu0 0
    %196 = vmatpush1.bf16.msra.mxu0 %v164
    %197 = vmatprep.subr.bf16.mxu0 0
    %198 = vmatpush1.bf16.msra.mxu0 %v163
    %199 = vmatprep.subr.bf16.mxu0 0
    %200 = vmatpush1.bf16.msra.mxu0 %v162
    %201 = vmatprep.subr.bf16.mxu0 0
    %202 = vmatpush1.bf16.msra.mxu0 %v161
    %203 = vmatprep.subr.bf16.mxu0 0
    %204 = vmatpush1.bf16.msra.mxu0 %v160
    %205 = vmatprep.subr.bf16.mxu0 0
    %206 = vmatpush1.bf16.msra.mxu0 %v159
    %207 = vmatprep.subr.bf16.mxu0 0
    %208 = vmatpush2.bf16.msra.mxu0 %v174
    %209 = vmatprep.subr.bf16.mxu0 0
    %210 = vmatpush2.bf16.msra.mxu0 %v173
    %211 = vmatprep.subr.bf16.mxu0 0
    %212 = vmatpush2.bf16.msra.mxu0 %v172
    %213 = vmatprep.subr.bf16.mxu0 0
    %214 = vmatpush2.bf16.msra.mxu0 %v171
    %215 = vmatprep.subr.bf16.mxu0 0
    %216 = vmatpush2.bf16.msra.mxu0 %v170
    %217 = vmatprep.subr.bf16.mxu0 0
    %218 = vmatpush2.bf16.msra.mxu0 %v169
    %219 = vmatprep.subr.bf16.mxu0 0
    %220 = vmatpush2.bf16.msra.mxu0 %v168
    %221 = vmatprep.subr.bf16.mxu0 0
    %222 = vmatpush2.bf16.msra.mxu0 %v167
    %223 = vmatprep.mubr.bf16.mxu0 %v92
    %224 = vmatmul.mubr.bf16.gmra.mxu0 %v91
    %v225 = vpop.f32.mrf.mxu0
    %v226 = vadd.f32 0.0, %v225
    %v227 = vpop.f32.mrf.mxu0
    %v228 = vpop.f32.mrf.mxu0
    %v229 = vpop.f32.mrf.mxu0
    %230 = vdwg.mxu0
    %v231 = vmul.f32 %v226, %v226
    %232 = vadd.xlane.f32.xlu0 %v231
    %v233 = vpop.xlane.xlu0 %232
    %v234 = vmax.f32 %v233, 1e-12
    %v235 = vrsqrt.pop %v234
    %v236 = vmul.f32 %v226, %v235
    %v237 = vpack.c.bf16 %v236, %v236
    %v238 = vld [vmem:[#allocation7] sm:$0xf]
    %v239 = vld [vmem:[#allocation7 + $0x4] sm:$0xf]
    %v240 = vld [vmem:[#allocation7 + $0x8] sm:$0xf]
    %v241 = vld [vmem:[#allocation7 + $0xc] sm:$0xf]
    %v242 = vld [vmem:[#allocation7 + $0x10] sm:$0xf]
    %v243 = vld [vmem:[#allocation7 + $0x14] sm:$0xf]
    %v244 = vld [vmem:[#allocation7 + $0x18] sm:$0xf]
    %v245 = vld [vmem:[#allocation7 + $0x1c] sm:$0xf]
    %v246 = vld [vmem:[#allocation7 + $0x20] sm:$0xf]
    %v247 = vld [vmem:[#allocation7 + $0x24] sm:$0xf]
    %v248 = vld [vmem:[#allocation7 + $0x28] sm:$0xf]
    %v249 = vld [vmem:[#allocation7 + $0x2c] sm:$0xf]
    %v250 = vld [vmem:[#allocation7 + $0x30] sm:$0xf]
    %v251 = vld [vmem:[#allocation7 + $0x34] sm:$0xf]
    %v252 = vld [vmem:[#allocation7 + $0x38] sm:$0xf]
    %v253 = vld [vmem:[#allocation7 + $0x3c] sm:$0xf]
    %v270 = vunpack.c.l.b16 %v238
    %v271 = vunpack.c.l.b16 %v239
    %v272 = vunpack.c.l.b16 %v240
    %v273 = vunpack.c.l.b16 %v241
    %v274 = vunpack.c.l.b16 %v242
    %v275 = vunpack.c.l.b16 %v243
    %v276 = vunpack.c.l.b16 %v244
    %v277 = vunpack.c.l.b16 %v245
    %v278 = vunpack.c.l.b16 %v246
    %v279 = vunpack.c.l.b16 %v247
    %v280 = vunpack.c.l.b16 %v248
    %v281 = vunpack.c.l.b16 %v249
    %v282 = vunpack.c.l.b16 %v250
    %v283 = vunpack.c.l.b16 %v251
    %v284 = vunpack.c.l.b16 %v252
    %v285 = vunpack.c.l.b16 %v253
    %v286 = vpack.c.b16 %v271, %v270
    %v287 = vpack.c.b16 %v273, %v272
    %v288 = vpack.c.b16 %v275, %v274
    %v289 = vpack.c.b16 %v277, %v276
    %v290 = vpack.c.b16 %v279, %v278
    %v291 = vpack.c.b16 %v281, %v280
    %v292 = vpack.c.b16 %v283, %v282
    %v293 = vpack.c.b16 %v285, %v284
    %302 = vmatprep.subr.bf16.mxu0 0
    %303 = vmatpush1.bf16.msra.mxu0 %v293
    %304 = vmatprep.subr.bf16.mxu0 0
    %305 = vmatpush1.bf16.msra.mxu0 %v292
    %306 = vmatprep.subr.bf16.mxu0 0
    %307 = vmatpush1.bf16.msra.mxu0 %v291
    %308 = vmatprep.subr.bf16.mxu0 0
    %309 = vmatpush1.bf16.msra.mxu0 %v290
    %310 = vmatprep.subr.bf16.mxu0 0
    %311 = vmatpush1.bf16.msra.mxu0 %v289
    %312 = vmatprep.subr.bf16.mxu0 0
    %313 = vmatpush1.bf16.msra.mxu0 %v288
    %314 = vmatprep.subr.bf16.mxu0 0
    %315 = vmatpush1.bf16.msra.mxu0 %v287
    %316 = vmatprep.subr.bf16.mxu0 0
    %317 = vmatpush1.bf16.msra.mxu0 %v286
    %318 = vmatprep.subr.bf16.mxu0 0
    %319 = vmatpush2.bf16.msra.mxu0 0
    %320 = vmatprep.subr.bf16.mxu0 0
    %321 = vmatpush2.bf16.msra.mxu0 0
    %322 = vmatprep.subr.bf16.mxu0 0
    %323 = vmatpush2.bf16.msra.mxu0 0
    %324 = vmatprep.subr.bf16.mxu0 0
    %325 = vmatpush2.bf16.msra.mxu0 0
    %326 = vmatprep.subr.bf16.mxu0 0
    %327 = vmatpush2.bf16.msra.mxu0 0
    %328 = vmatprep.subr.bf16.mxu0 0
    %329 = vmatpush2.bf16.msra.mxu0 0
    %330 = vmatprep.subr.bf16.mxu0 0
    %331 = vmatpush2.bf16.msra.mxu0 0
    %332 = vmatprep.subr.bf16.mxu0 0
    %333 = vmatpush2.bf16.msra.mxu0 0
    %334 = vmatprep.mubr.bf16.mxu0 0
    %335 = vmatmul.mubr.bf16.gmra.mxu0 %v237
    %v336 = vpop.f32.mrf.mxu0
    %v337 = vadd.f32 0.0, %v336
    %v338 = vpop.f32.mrf.mxu0
    %v339 = vpop.f32.mrf.mxu0
    %v340 = vpop.f32.mrf.mxu0
    %341 = vdwg.mxu0
    %342 = vst [vmem:[#allocation8] sm:$0xff] %v337
    // Predicated region
    $region26: #{tpu_custom_call.1} parent=1 // pred_check
      _
    $region27: #{tpu_custom_call.1} parent=1 // pred_check_branch
      %344 = sbr.rel (0) target = $region29
    $region28: #{tpu_custom_call.1} parent=1 // pred_region
      %s346 = ssub.s32 128, 128
      %347 = vsyncadd [#allocation4], %s346
      %s349 = sshll.u32 [#allocation8], 4
      %s350 = int_to_ptr.vmem [resolvable:$true] %s349
      %352 = dma.vmem_to_hbm [thread:$0]  %s350, 128, %s3, [#allocation4]
    $region29: #{tpu_custom_call.1} parent=1 // pred_fallthru
      _
    // Predicated region
    $region30: #{tpu_custom_call.1} parent=1 // pred_check
      _
    $region31: #{tpu_custom_call.1} parent=1 // pred_check_branch
      %354 = sbr.rel (0) target = $region33
    $region32: #{tpu_custom_call.1} parent=1 // pred_region
      %355 = dma.done [#allocation4], 128
    $region33: #{tpu_custom_call.1} parent=1 // pred_fallthru
      _
    %356 = vsyncpa [#allocation3], 1
    %357 = vsyncpa [#allocation6], 1
    %358 = vsyncpa [#allocation4], 1

</llo_original>
